<compile_context>
chip_gen: v7x
topology: tpu7x:2x2x1
jax: 0.10.0
libtpu: 0.0.40
codegen_flags: <defaults>
</compile_context>

<pallas_src>
import functools

import jax
import jax.numpy as jnp
from jax.experimental import pallas as pl
from jax.experimental.pallas import tpu as pltpu


LN_EPS = 1e-12  # matches the reference module: nn.LayerNorm(d_model, eps=1e-12)


# ----------------------------------------------------------------------------
# Small helpers: tiling, padding, VMEM budget, single-buffered constant specs
# ----------------------------------------------------------------------------
def _round_up(x, m):
    return (x + m - 1) // m * m


def _row_tiling(n, target=256):
    """Pick (padded_n, row_tile). Tiles are multiples of 8, target 256 rows (~85% of HBM
    roofline vs 29% at 128), and we force >=2 grid steps when possible so both v7x
    TensorCores get work under dimension_semantics=('parallel', ...)."""
    n8 = _round_up(n, 8)
    if n8 <= 8:
        return n8, n8
    steps = max(2, pl.cdiv(n8, target))
    bm = _round_up(pl.cdiv(n8, steps), 8)
    return _round_up(n8, bm), bm


def _pad_rows(x, n_pad):
    n = x.shape[0]
    if n_pad == n:
        return x
    return jnp.pad(x, ((0, n_pad - n), (0, 0)))


@functools.lru_cache(maxsize=None)
def _vmem_limit_bytes():
    """Scoped-VMEM budget: physical capacity minus DMA headroom (defaults are only 16-32 MiB).
    ~120 MiB on v5e/v6e (128 MiB VMEM), ~56 MiB on v7x (64 MiB per TensorCore)."""
    try:
        cap = int(pltpu.get_tpu_info().vmem_capacity_bytes)
    except Exception:
        cap = 64 * 1024 * 1024
    return max(cap - 8 * 1024 * 1024, 32 * 1024 * 1024)


def _compiler_params(semantics):
    return pltpu.CompilerParams(dimension_semantics=semantics,
                                vmem_limit_bytes=_vmem_limit_bytes())


@functools.lru_cache(maxsize=None)
def _single_buffer_ok():
    """Probe (once) whether pipeline_mode=pl.Buffered(1) compiles & runs on this JAX/libtpu."""
    if not hasattr(pl, "Buffered"):
        return False

    def _copy(x_ref, o_ref):
        o_ref[...] = x_ref[...]

    try:
        fn = pl.pallas_call(
            _copy,
            out_shape=jax.ShapeDtypeStruct((8, 128), jnp.float32),
            grid=(2,),
            in_specs=[pl.BlockSpec((8, 128), lambda i: (0, 0),
                                   pipeline_mode=pl.Buffered(1))],
            out_specs=pl.BlockSpec((8, 128), lambda i: (0, 0)),
        )
        jax.block_until_ready(fn(jnp.zeros((8, 128), jnp.float32)))
        return True
    except Exception:
        return False


def _const_spec(shape):
    """BlockSpec for a grid-invariant operand (weights / biases / LN params): same block on
    every grid step. Single-buffered when supported - default double-buffering would double
    resident-weight VMEM for blocks that never change."""
    idx = lambda *_: (0,) * len(shape)
    if _single_buffer_ok():
        return pl.BlockSpec(shape, idx, pipeline_mode=pl.Buffered(1))
    return pl.BlockSpec(shape, idx)


# ----------------------------------------------------------------------------
# Pallas kernels
# ----------------------------------------------------------------------------
def _fused_linear_kernel(*refs, n_out):
    # refs = (x, w_0..w_{n-1}, b_0..b_{n-1}, o_0..o_{n-1}); w pre-transposed (Din, Dout), bf16.
    x = refs[0][...].astype(jnp.bfloat16)      # bf16 MXU operands, f32 accumulation
    for i in range(n_out):
        w = refs[1 + i][...]
        b = refs[1 + n_out + i][...]
        o_ref = refs[1 + 2 * n_out + i]
        y = jnp.dot(x, w, preferred_element_type=jnp.float32) + b
        o_ref[...] = y.astype(o_ref.dtype)


def _mha_core_kernel(q_ref, k_ref, v_ref, o_ref, *, nhead):
    # One batch element per grid step: q_ref (T, D), k_ref/v_ref (S, D). All heads handled with
    # static column slices; each head's result is stored directly into its o_ref column window
    # (no concatenated temp). 1/sqrt(head_dim) is already folded into the Q projection weights.
    q = q_ref[...]
    k = k_ref[...]
    v = v_ref[...]
    d = q.shape[-1]
    dh = d // nhead
    for h in range(nhead):
        lo = h * dh
        qh = q[:, lo:lo + dh].astype(jnp.bfloat16)
        kh = k[:, lo:lo + dh].astype(jnp.bfloat16)
        vh = v[:, lo:lo + dh].astype(jnp.bfloat16)
        s = jax.lax.dot_general(qh, kh, (((1,), (1,)), ((), ())),
                                preferred_element_type=jnp.float32)
        m = jnp.max(s, axis=-1, keepdims=True)               # softmax stats in f32
        p = jnp.exp(s - m)
        inv = 1.0 / jnp.sum(p, axis=-1, keepdims=True)        # exact (matches torch softmax)
        p = (p * inv).astype(jnp.bfloat16)
        o_h = jnp.dot(p, vh, preferred_element_type=jnp.float32)
        o_ref[:, lo:lo + dh] = o_h.astype(o_ref.dtype)
    # TODO(synk): for long S/T switch to a KV-chunked online-softmax (flash) grid axis instead
    # of materializing the full (T, S) score matrix per head.


def _proj_add_ln_kernel(x_ref, w_ref, b_ref, res_ref, g_ref, bln_ref, o_ref, *, eps):
    # out-projection + residual add + LayerNorm fused epilogue (LN statistics in f32).
    y = jnp.dot(x_ref[...].astype(jnp.bfloat16), w_ref[...],
                preferred_element_type=jnp.float32) + b_ref[...]
    z = res_ref[...] + y
    mu = jnp.mean(z, axis=-1, keepdims=True)
    var = jnp.mean((z - mu) * (z - mu), axis=-1, keepdims=True)
    zn = (z - mu) * jax.lax.rsqrt(var + eps)
    o_ref[...] = (zn * g_ref[...] + bln_ref[...]).astype(o_ref.dtype)


def _ffn_add_ln_kernel(x_ref, w1_ref, b1_ref, w2_ref, b2_ref, g_ref, bln_ref,
                       o_ref, acc_ref, *, eps):
    # linear1 + exact erf-GELU + linear2 over one FF chunk; linear2 partials accumulated in a
    # VMEM f32 scratch; residual + LayerNorm finalized on the last chunk. h never hits HBM.
    j = pl.program_id(1)

    @pl.when(j == 0)
    def _init():
        acc_ref[...] = jnp.zeros_like(acc_ref)

    x = x_ref[...]
    h = jnp.dot(x.astype(jnp.bfloat16), w1_ref[...],
                preferred_element_type=jnp.float32) + b1_ref[...]
    h = 0.5 * h * (1.0 + jax.lax.erf(h * 0.7071067811865476))   # exact erf-GELU (F.gelu)
    acc_ref[...] += jnp.dot(h.astype(jnp.bfloat16), w2_ref[...],
                            preferred_element_type=jnp.float32)

    @pl.when(j == pl.num_programs(1) - 1)
    def _finalize():
        z = x + acc_ref[...] + b2_ref[...]
        mu = jnp.mean(z, axis=-1, keepdims=True)
        var = jnp.mean((z - mu) * (z - mu), axis=-1, keepdims=True)
        zn = (z - mu) * jax.lax.rsqrt(var + eps)
        o_ref[...] = (zn * g_ref[...] + bln_ref[...]).astype(o_ref.dtype)


# ----------------------------------------------------------------------------
# Wrappers (pallas_call plumbing)
# ----------------------------------------------------------------------------
def fused_linear(x, weights, biases):
    """y_i = x @ weights[i] + biases[i] for all i in ONE kernel (x read from HBM once).
    x: (N, Din) f32; weights[i]: (Din, Dout_i) bf16 (pre-transposed); biases[i]: (Dout_i,) f32."""
    n, din = x.shape
    n_out = len(weights)
    n_pad, bm = _row_tiling(n)
    in_specs = [pl.BlockSpec((bm, din), lambda i: (i, 0))]
    in_specs += [_const_spec(tuple(w.shape)) for w in weights]
    in_specs += [_const_spec((1, int(b.shape[0]))) for b in biases]
    out_specs = [pl.BlockSpec((bm, int(w.shape[1])), lambda i: (i, 0)) for w in weights]
    out_shape = [jax.ShapeDtypeStruct((n_pad, int(w.shape[1])), x.dtype) for w in weights]
    # TODO(synk): for very large Din/Dout add K/N grid axes (tiles in multiples of 256 to fill
    # the v6e/v7x 256x256 MXU) with a VMEM f32 accumulator.
    outs = pl.pallas_call(
        functools.partial(_fused_linear_kernel, n_out=n_out),
        out_shape=out_shape,
        grid=(n_pad // bm,),
        in_specs=in_specs,
        out_specs=out_specs,
        compiler_params=_compiler_params(("parallel",)),
    )(_pad_rows(x, n_pad), *weights, *[b.reshape(1, -1) for b in biases])
    if n_pad != n:
        outs = [o[:n] for o in outs]
    return outs


def mha_core(q, k, v, nhead):
    """q: (B, T, D), k/v: (B, S, D) -> (B, T, D); one grid step per batch, all heads inside.
    Keep B >= 2 so the 'parallel' batch axis feeds both v7x TensorCores."""
    b, t, d = q.shape
    s = k.shape[1]
    assert d % nhead == 0, "d_model must be divisible by nhead"
    return pl.pallas_call(
        functools.partial(_mha_core_kernel, nhead=nhead),
        out_shape=jax.ShapeDtypeStruct((b, t, d), q.dtype),
        grid=(b,),
        in_specs=[
            pl.BlockSpec((None, t, d), lambda i: (i, 0, 0)),
            pl.BlockSpec((None, s, d), lambda i: (i, 0, 0)),
            pl.BlockSpec((None, s, d), lambda i: (i, 0, 0)),
        ],
        out_specs=pl.BlockSpec((None, t, d), lambda i: (i, 0, 0)),
        compiler_params=_compiler_params(("parallel",)),
    )(q, k, v)


def proj_add_layernorm(x, w, b, residual, gamma, beta, eps):
    n, din = x.shape
    dout = int(w.shape[1])
    n_pad, bm = _row_tiling(n)
    out = pl.pallas_call(
        functools.partial(_proj_add_ln_kernel, eps=eps),
        out_shape=jax.ShapeDtypeStruct((n_pad, dout), x.dtype),
        grid=(n_pad // bm,),
        in_specs=[
            pl.BlockSpec((bm, din), lambda i: (i, 0)),
            _const_spec((din, dout)),
            _const_spec((1, dout)),
            pl.BlockSpec((bm, dout), lambda i: (i, 0)),
            _const_spec((1, dout)),
            _const_spec((1, dout)),
        ],
        out_specs=pl.BlockSpec((bm, dout), lambda i: (i, 0)),
        compiler_params=_compiler_params(("parallel",)),
    )(_pad_rows(x, n_pad), w, b.reshape(1, dout), _pad_rows(residual, n_pad),
      gamma.reshape(1, dout), beta.reshape(1, dout))
    return out[:n] if n_pad != n else out


def _ff_chunk(ff):
    """FF-chunk width: bounds per-step VMEM ((D,bf)+(bf,D) weights) while keeping the 256-wide
    v6e/v7x MXU fed; prefer >=2 chunks so weight DMA overlaps compute."""
    for c in (512, 256, 128):
        if ff % c == 0 and ff // c >= 2:
            return c
    return ff


def ffn_add_layernorm(x, w1, b1, w2, b2, gamma, beta, eps):
    n, d = x.shape
    ff = int(w1.shape[1])
    n_pad, bm = _row_tiling(n)
    bf = _ff_chunk(ff)
    out = pl.pallas_call(
        functools.partial(_ffn_add_ln_kernel, eps=eps),
        out_shape=jax.ShapeDtypeStruct((n_pad, d), x.dtype),
        grid=(n_pad // bm, ff // bf),
        in_specs=[
            pl.BlockSpec((bm, d), lambda i, j: (i, 0)),   # x (resident across FF chunks)
            pl.BlockSpec((d, bf), lambda i, j: (0, j)),   # w1 chunk (streamed, double-buffered)
            pl.BlockSpec((1, bf), lambda i, j: (0, j)),   # b1 chunk
            pl.BlockSpec((bf, d), lambda i, j: (j, 0)),   # w2 chunk (streamed)
            _const_spec((1, d)),                          # b2
            _const_spec((1, d)),                          # gamma
            _const_spec((1, d)),                          # beta
        ],
        out_specs=pl.BlockSpec((bm, d), lambda i, j: (i, 0)),
        scratch_shapes=[pltpu.VMEM((bm, d), jnp.float32)],
        compiler_params=_compiler_params(("parallel", "arbitrary")),
    )(_pad_rows(x, n_pad), w1, b1.reshape(1, ff), w2, b2.reshape(1, d),
      gamma.reshape(1, d), beta.reshape(1, d))
    return out[:n] if n_pad != n else out


# ----------------------------------------------------------------------------
# Attention blocks + full layer (batch-first internal layout)
# ----------------------------------------------------------------------------
def self_attention_block(x, p, nhead, batch, t, d, ln_g, ln_b, eps):
    q, k, v = fused_linear(x, [p["wq"], p["wk"], p["wv"]], [p["bq"], p["bk"], p["bv"]])
    attn = mha_core(q.reshape(batch, t, d), k.reshape(batch, t, d),
                    v.reshape(batch, t, d), nhead)
    return proj_add_layernorm(attn.reshape(batch * t, d), p["wo"], p["bo"], x, ln_g, ln_b, eps)


def cross_attention_block(x, mem, p, nhead, batch, t, s, d, ln_g, ln_b, eps):
    (q,) = fused_linear(x, [p["wq"]], [p["bq"]])
    k, v = fused_linear(mem, [p["wk"], p["wv"]], [p["bk"], p["bv"]])
    attn = mha_core(q.reshape(batch, t, d), k.reshape(batch, s, d),
                    v.reshape(batch, s, d), nhead)
    return proj_add_layernorm(attn.reshape(batch * t, d), p["wo"], p["bo"], x, ln_g, ln_b, eps)


def transformer_decoder_layer(tgt, memory, params, nhead):
    # Mirrors TransformerDecoderLayer.forward (eval mode: all dropouts are identity; @autocast()
    # realized as bf16 MXU operands with f32 accumulation / f32 softmax+LayerNorm statistics).
    t, b, d = tgt.shape
    s = memory.shape[0]
    # TODO(synk): fold these seq-first <-> batch-first conversions into the first/last kernels'
    # BlockSpecs to remove two activation HBM round-trips per layer.
    x = tgt.transpose(1, 0, 2).reshape(b * t, d)
    mem = memory.transpose(1, 0, 2).reshape(b * s, d)

    x = self_attention_block(x, params["self_attn"], nhead, b, t, d,
                             params["ln1_g"], params["ln1_b"], LN_EPS)
    x = cross_attention_block(x, mem, params["cross_attn"], nhead, b, t, s, d,
                              params["ln2_g"], params["ln2_b"], LN_EPS)
    x = ffn_add_layernorm(x, params["lin1_w"], params["lin1_b"],
                          params["lin2_w"], params["lin2_b"],
                          params["ln3_g"], params["ln3_b"], LN_EPS)
    return x.reshape(b, t, d).transpose(1, 0, 2)      # back to (T, B, D)


# ----------------------------------------------------------------------------
# Deterministic parameter init.
# Weights stored pre-transposed as (Din, Dout) and cast to bf16; the 1/sqrt(head_dim) attention
# scale is folded into wq/bq ONCE here (do the same when importing PyTorch nn.Linear weights).
# ----------------------------------------------------------------------------
def init_attn_params(key, d_model, nhead):
    ks = jax.random.split(key, 4)
    scale = 1.0 / float(d_model // nhead) ** 0.5
    z = jnp.zeros((d_model,), jnp.float32)

    def w(k):
        return 0.05 * jax.random.normal(k, (d_model, d_model), jnp.float32)

    return {
        "wq": (w(ks[0]) * scale).astype(jnp.bfloat16),   # scale folded in f32, then cast
        "wk": w(ks[1]).astype(jnp.bfloat16),
        "wv": w(ks[2]).astype(jnp.bfloat16),
        "bq": z * scale, "bk": z, "bv": z,               # biases kept f32
        "wo": w(ks[3]).astype(jnp.bfloat16),
        "bo": z,
    }


def init_params(key, d_model, dim_feedforward, nhead):
    k1, k2, k3, k4 = jax.random.split(key, 4)
    ones = jnp.ones((d_model,), jnp.float32)
    zeros = jnp.zeros((d_model,), jnp.float32)
    return {
        "self_attn": init_attn_params(k1, d_model, nhead),
        "cross_attn": init_attn_params(k2, d_model, nhead),
        "lin1_w": (0.05 * jax.random.normal(k3, (d_model, dim_feedforward),
                                            jnp.float32)).astype(jnp.bfloat16),
        "lin1_b": jnp.zeros((dim_feedforward,), jnp.float32),
        "lin2_w": (0.05 * jax.random.normal(k4, (dim_feedforward, d_model),
                                            jnp.float32)).astype(jnp.bfloat16),
        "lin2_b": zeros,
        "ln1_g": ones, "ln1_b": zeros,
        "ln2_g": ones, "ln2_b": zeros,
        "ln3_g": ones, "ln3_b": zeros,
    }


if __name__ == "__main__":
    T, S, B = 8, 16, 2          # target seq len, memory seq len, batch (B>=2 for both v7x cores)
    D, H, FF = 128, 4, 256      # d_model (lane-dense), heads, dim_feedforward (small demo)

    root = jax.random.PRNGKey(0)
    kp, kt, km = jax.random.split(root, 3)
    params = init_params(kp, D, FF, H)

    tgt = jax.random.normal(kt, (T, B, D), jnp.float32)       # (T, B, D) seq-first
    memory = jax.random.normal(km, (S, B, D), jnp.float32)    # (S, B, D) seq-first

    out = transformer_decoder_layer(tgt, memory, params, nhead=H)
    out = jax.block_until_ready(out)
    assert out.shape == (T, B, D)
    assert bool(jnp.all(jnp.isfinite(out)))
    print("KERNEL_OK")
</pallas_src>

<mosaic_0001>
module attributes {stable_mosaic.version = 11 : i64} {
  func.func @_copy(%arg0: i32, %arg1: memref<8x128xf32, #tpu.memory_space<vmem>>, %arg2: memref<8x128xf32, #tpu.memory_space<vmem>>) attributes {dimension_semantics = [#tpu.dimension_semantics<arbitrary>], iteration_bounds = array<i64: 2>, scalar_prefetch = 0 : i64, scratch_operands = 0 : i64, tpu.core_type = #tpu.core_type<tc>, window_params = [{pipeline_mode = #tpu.pipeline_mode<synchronous>, transform_indices = @transform_0, window_bounds = array<i64: 8, 128>}, {pipeline_mode = #tpu.pipeline_mode<synchronous>, transform_indices = @transform_1, window_bounds = array<i64: 8, 128>}]} {
    %c0 = arith.constant 0 : index
    %c0_0 = arith.constant 0 : index
    %0 = vector.load %arg1[%c0, %c0_0] : memref<8x128xf32, #tpu.memory_space<vmem>>, vector<8x128xf32>
    %c0_1 = arith.constant 0 : index
    %c0_2 = arith.constant 0 : index
    %1 = vector.load %arg2[%c0_1, %c0_2] : memref<8x128xf32, #tpu.memory_space<vmem>>, vector<8x128xf32>
    tpu.vector_store %arg2[%c0_1, %c0_2], %0 {strides = array<i32>} : memref<8x128xf32, #tpu.memory_space<vmem>>, vector<8x128xf32>,
    return
  }
  func.func @transform_0(%arg0: i32) -> (i32, i32) {
    %c0_i32 = arith.constant 0 : i32
    %c0_i32_0 = arith.constant 0 : i32
    %c0_i32_1 = arith.constant 0 : i32
    return %c0_i32, %c0_i32_0 : i32, i32
  }
  func.func @transform_1(%arg0: i32) -> (i32, i32) {
    %c0_i32 = arith.constant 0 : i32
    %c0_i32_0 = arith.constant 0 : i32
    %c0_i32_1 = arith.constant 0 : i32
    return %c0_i32, %c0_i32_0 : i32, i32
  }
}

module attributes {stable_mosaic.version = 11 : i64} {
  func.func @_fused_linear_kernel(%arg0: i32, %arg1: memref<8x128xf32, #tpu.memory_space<vmem>>, %arg2: memref<128x128xbf16, #tpu.memory_space<vmem>>, %arg3: memref<128x128xbf16, #tpu.memory_space<vmem>>, %arg4: memref<128x128xbf16, #tpu.memory_space<vmem>>, %arg5: memref<1x128xf32, #tpu.memory_space<vmem>>, %arg6: memref<1x128xf32, #tpu.memory_space<vmem>>, %arg7: memref<1x128xf32, #tpu.memory_space<vmem>>, %arg8: memref<8x128xf32, #tpu.memory_space<vmem>>, %arg9: memref<8x128xf32, #tpu.memory_space<vmem>>, %arg10: memref<8x128xf32, #tpu.memory_space<vmem>>) attributes {dimension_semantics = [#tpu.dimension_semantics<parallel>], iteration_bounds = array<i64: 2>, scalar_prefetch = 0 : i64, scratch_operands = 0 : i64, tpu.core_type = #tpu.core_type<tc>, window_params = [{transform_indices = @transform_0, window_bounds = array<i64: 8, 128>}, {pipeline_mode = #tpu.pipeline_mode<synchronous>, transform_indices = @transform_1, window_bounds = array<i64: 128, 128>}, {pipeline_mode = #tpu.pipeline_mode<synchronous>, transform_indices = @transform_2, window_bounds = array<i64: 128, 128>}, {pipeline_mode = #tpu.pipeline_mode<synchronous>, transform_indices = @transform_3, window_bounds = array<i64: 128, 128>}, {pipeline_mode = #tpu.pipeline_mode<synchronous>, transform_indices = @transform_4, window_bounds = array<i64: 1, 128>}, {pipeline_mode = #tpu.pipeline_mode<synchronous>, transform_indices = @transform_5, window_bounds = array<i64: 1, 128>}, {pipeline_mode = #tpu.pipeline_mode<synchronous>, transform_indices = @transform_6, window_bounds = array<i64: 1, 128>}, {transform_indices = @transform_7, window_bounds = array<i64: 8, 128>}, {transform_indices = @transform_8, window_bounds = array<i64: 8, 128>}, {transform_indices = @transform_9, window_bounds = array<i64: 8, 128>}]} {
    %c0 = arith.constant 0 : index
    %c0_0 = arith.constant 0 : index
    %0 = vector.load %arg1[%c0, %c0_0] : memref<8x128xf32, #tpu.memory_space<vmem>>, vector<8x128xf32>
    %1 = arith.truncf %0 : vector<8x128xf32> to vector<8x128xbf16>
    %c0_1 = arith.constant 0 : index
    %c0_2 = arith.constant 0 : index
    %2 = vector.load %arg2[%c0_1, %c0_2] : memref<128x128xbf16, #tpu.memory_space<vmem>>, vector<128x128xbf16>
    %c0_3 = arith.constant 0 : index
    %c0_4 = arith.constant 0 : index
    %3 = vector.load %arg5[%c0_3, %c0_4] : memref<1x128xf32, #tpu.memory_space<vmem>>, vector<1x128xf32>
    %cst = arith.constant dense<0.000000e+00> : vector<8x128xf32>
    %4 = tpu.matmul %1, %2, %cst {dimension_numbers = #tpu.dot_dimension_numbers<[1], [0], [0], [1], [0, 0, 1, 1], [], []>} : vector<8x128xbf16>, vector<128x128xbf16>, vector<8x128xf32> -> vector<8x128xf32>
    %5 = vector.broadcast %3 : vector<1x128xf32> to vector<8x128xf32>
    %6 = arith.addf %4, %5 : vector<8x128xf32>
    %c0_5 = arith.constant 0 : index
    %c0_6 = arith.constant 0 : index
    %7 = vector.load %arg8[%c0_5, %c0_6] : memref<8x128xf32, #tpu.memory_space<vmem>>, vector<8x128xf32>
    tpu.vector_store %arg8[%c0_5, %c0_6], %6 {strides = array<i32>} : memref<8x128xf32, #tpu.memory_space<vmem>>, vector<8x128xf32>,
    %c0_7 = arith.constant 0 : index
    %c0_8 = arith.constant 0 : index
    %8 = vector.load %arg3[%c0_7, %c0_8] : memref<128x128xbf16, #tpu.memory_space<vmem>>, vector<128x128xbf16>
    %c0_9 = arith.constant 0 : index
    %c0_10 = arith.constant 0 : index
    %9 = vector.load %arg6[%c0_9, %c0_10] : memref<1x128xf32, #tpu.memory_space<vmem>>, vector<1x128xf32>
    %cst_11 = arith.constant dense<0.000000e+00> : vector<8x128xf32>
    %10 = tpu.matmul %1, %8, %cst_11 {dimension_numbers = #tpu.dot_dimension_numbers<[1], [0], [0], [1], [0, 0, 1, 1], [], []>} : vector<8x128xbf16>, vector<128x128xbf16>, vector<8x128xf32> -> vector<8x128xf32>
    %11 = vector.broadcast %9 : vector<1x128xf32> to vector<8x128xf32>
    %12 = arith.addf %10, %11 : vector<8x128xf32>
    %c0_12 = arith.constant 0 : index
    %c0_13 = arith.constant 0 : index
    %13 = vector.load %arg9[%c0_12, %c0_13] : memref<8x128xf32, #tpu.memory_space<vmem>>, vector<8x128xf32>
    tpu.vector_store %arg9[%c0_12, %c0_13], %12 {strides = array<i32>} : memref<8x128xf32, #tpu.memory_space<vmem>>, vector<8x128xf32>,
    %c0_14 = arith.constant 0 : index
    %c0_15 = arith.constant 0 : index
    %14 = vector.load %arg4[%c0_14, %c0_15] : memref<128x128xbf16, #tpu.memory_space<vmem>>, vector<128x128xbf16>
    %c0_16 = arith.constant 0 : index
    %c0_17 = arith.constant 0 : index
    %15 = vector.load %arg7[%c0_16, %c0_17] : memref<1x128xf32, #tpu.memory_space<vmem>>, vector<1x128xf32>
    %cst_18 = arith.constant dense<0.000000e+00> : vector<8x128xf32>
    %16 = tpu.matmul %1, %14, %cst_18 {dimension_numbers = #tpu.dot_dimension_numbers<[1], [0], [0], [1], [0, 0, 1, 1], [], []>} : vector<8x128xbf16>, vector<128x128xbf16>, vector<8x128xf32> -> vector<8x128xf32>
    %17 = vector.broadcast %15 : vector<1x128xf32> to vector<8x128xf32>
    %18 = arith.addf %16, %17 : vector<8x128xf32>
    %c0_19 = arith.constant 0 : index
    %c0_20 = arith.constant 0 : index
    %19 = vector.load %arg10[%c0_19, %c0_20] : memref<8x128xf32, #tpu.memory_space<vmem>>, vector<8x128xf32>
    tpu.vector_store %arg10[%c0_19, %c0_20], %18 {strides = array<i32>} : memref<8x128xf32, #tpu.memory_space<vmem>>, vector<8x128xf32>,
    return
  }
  func.func @transform_0(%arg0: i32) -> (i32, i32) {
    %c0_i32 = arith.constant 0 : i32
    %c0_i32_0 = arith.constant 0 : i32
    return %arg0, %c0_i32 : i32, i32
  }
  func.func @transform_1(%arg0: i32) -> (i32, i32) {
    %c0_i32 = arith.constant 0 : i32
    %c0_i32_0 = arith.constant 0 : i32
    %c0_i32_1 = arith.constant 0 : i32
    return %c0_i32, %c0_i32_0 : i32, i32
  }
  func.func @transform_2(%arg0: i32) -> (i32, i32) {
    %c0_i32 = arith.constant 0 : i32
    %c0_i32_0 = arith.constant 0 : i32
    %c0_i32_1 = arith.constant 0 : i32
    return %c0_i32, %c0_i32_0 : i32, i32
  }
  func.func @transform_3(%arg0: i32) -> (i32, i32) {
    %c0_i32 = arith.constant 0 : i32
    %c0_i32_0 = arith.constant 0 : i32
    %c0_i32_1 = arith.constant 0 : i32
    return %c0_i32, %c0_i32_0 : i32, i32
  }
  func.func @transform_4(%arg0: i32) -> (i32, i32) {
    %c0_i32 = arith.constant 0 : i32
    %c0_i32_0 = arith.constant 0 : i32
    %c0_i32_1 = arith.constant 0 : i32
    return %c0_i32, %c0_i32_0 : i32, i32
  }
  func.func @transform_5(%arg0: i32) -> (i32, i32) {
    %c0_i32 = arith.constant 0 : i32
    %c0_i32_0 = arith.constant 0 : i32
    %c0_i32_1 = arith.constant 0 : i32
    return %c0_i32, %c0_i32_0 : i32, i32
  }
  func.func @transform_6(%arg0: i32) -> (i32, i32) {
    %c0_i32 = arith.constant 0 : i32
    %c0_i32_0 = arith.constant 0 : i32
    %c0_i32_1 = arith.constant 0 : i32
    return %c0_i32, %c0_i32_0 : i32, i32
  }
  func.func @transform_7(%arg0: i32) -> (i32, i32) {
    %c0_i32 = arith.constant 0 : i32
    %c0_i32_0 = arith.constant 0 : i32
    return %arg0, %c0_i32 : i32, i32
  }
  func.func @transform_8(%arg0: i32) -> (i32, i32) {
    %c0_i32 = arith.constant 0 : i32
    %c0_i32_0 = arith.constant 0 : i32
    return %arg0, %c0_i32 : i32, i32
  }
  func.func @transform_9(%arg0: i32) -> (i32, i32) {
    %c0_i32 = arith.constant 0 : i32
    %c0_i32_0 = arith.constant 0 : i32
    return %arg0, %c0_i32 : i32, i32
  }
}

</mosaic_0001>

<llo_original>
// kernel: tpu_custom_call.1
$region0: #{tpu_custom_call.1}
  #allocation0 [shape = 'u32[]', space=smem, size = 0x4, offset = 0x4, fixed_abs, tag = 'smem constant byte address 0x4 - core index']
  #allocation1 [shape = 'u32[144,128]{1,0:T(1,128)}', space=vmem, size = 0x12000, scoped, tag = 'internal scratch']
  %s0 = inlined_call_operand.hbm [shape: f32[8,128], index: 0, kind: input, shape index: {}]
  %s1 = inlined_call_operand.hbm [shape: f32[8,128], index: 1, kind: output, shape index: {}]
  %s2 = sld [smem:[#allocation0]]
  $region41: #{tpu_custom_call.1} parent=0
    _
  %s4 = ssub.s32 1, %s2
  %s5 = scalar_select 0, %s4, %s2
  $region1: #{tpu_custom_call.1} parent=0
    #allocation2 [shape = 'u8[4096]{0}', space=vmem, size = 0x1000, scoped, tag = 'input window, operand 0, single buffered']
    #allocation3 [shape = 's32[2]{0}', space=sflag, size = 0x8, scoped, tag = 'scoped memory for tpu_custom_call.1']
    #allocation4 [shape = 's32[2]{0}', space=sflag, size = 0x8, scoped, tag = 'scoped memory for tpu_custom_call.1']
    #allocation5 [shape = 'u8[4096]{0}', space=vmem, size = 0x1000, scoped, tag = 'output window, operand 0, single buffered']
    %6 = vsyncpa [#allocation3], 0
    %7 = vsyncpa [#allocation4], 0
    loop: start=0, step=1, limit=4
    $region2: #{tpu_custom_call.1} parent=1 // loop_pre_header
      _
    $region3: #{tpu_custom_call.1} parent=1 // loop_header
      %s9 = sphi 0, %s13
      %p10 = scmp.ge.s32.totalorder %s9, 4
      %s17 = sphi 0, %s17
      %s19 = sphi 0, %s17
      %s20 = sphi 0, %s19
      %s34 = sphi 0, %s20
      %s38 = sphi 0, %s38
      %s40 = sphi 0, %s38
      %s41 = sphi 0, %s40
      %s55 = sphi 0, %s41
    $region4: #{tpu_custom_call.1} parent=1 // loop_header_branch
      %12 = sbr.rel (%p10) target = $region8
    $region5: #{tpu_custom_call.1} parent=1 // loop_body
      %s14 = ssub.s32 %s9, 1
      %s15 = ssub.s32 %s9, 2
      %s16 = sadd.s32 %s9, 1
      %s18 = sadd.s32 %s17, 1
      %p21 = scmp.eq.s32.totalorder %s9, 1
      %p22 = scmp.ne.s32.totalorder %s17, %s19
      %p23 = scmp.eq.s32.totalorder %s9, 0
      %p24 = por %p22, %p23
      %p25 = scmp.ne.s32.totalorder %s17, %s19
      %p26 = scmp.eq.s32.totalorder %s14, 1
      %p27 = por %p25, %p26
      %p28 = scmp.ne.s32.totalorder %s19, %s20
      %p29 = scmp.eq.s32.totalorder %s14, 0
      %p30 = por %p28, %p29
      %p31 = scmp.ne.s32.totalorder %s19, %s20
      %p32 = scmp.eq.s32.totalorder %s15, 1
      %p33 = por %p31, %p32
      %p35 = scmp.ne.s32.totalorder %s20, %s34
      %p36 = scmp.eq.s32.totalorder %s15, 0
      %p37 = por %p35, %p36
      %s39 = sadd.s32 %s38, 1
      %p42 = scmp.eq.s32.totalorder %s9, 1
      %p43 = scmp.ne.s32.totalorder %s38, %s40
      %p44 = scmp.eq.s32.totalorder %s9, 0
      %p45 = por %p43, %p44
      %p46 = scmp.ne.s32.totalorder %s38, %s40
      %p47 = scmp.eq.s32.totalorder %s14, 1
      %p48 = por %p46, %p47
      %p49 = scmp.ne.s32.totalorder %s40, %s41
      %p50 = scmp.eq.s32.totalorder %s14, 0
      %p51 = por %p49, %p50
      %p52 = scmp.ne.s32.totalorder %s40, %s41
      %p53 = scmp.eq.s32.totalorder %s15, 1
      %p54 = por %p52, %p53
      %p56 = scmp.ne.s32.totalorder %s41, %s55
      %p57 = scmp.eq.s32.totalorder %s15, 0
      %p58 = por %p56, %p57
      %p59 = scmp.le.s32.totalorder 1, %s9
      %p60 = scmp.lt.s32.totalorder %s9, 3
      %p61 = pnand %p59, %p60
      %p62 = pneg %p61
      // Predicated region
      $region9: #{tpu_custom_call.1} parent=5 // pred_check
        _
      $region10: #{tpu_custom_call.1} parent=5 // pred_check_branch
        %64 = sbr.rel (%p61) target = $region12
      $region11: #{tpu_custom_call.1} parent=5 // pred_region
        %s65 = ssub.s32 %s9, 1
        // Predicated region
        $region13: #{tpu_custom_call.1} parent=11 // pred_check
          %p66 = pneg %p30
        $region14: #{tpu_custom_call.1} parent=11 // pred_check_branch
          %68 = sbr.rel (%p66) target = $region16
        $region15: #{tpu_custom_call.1} parent=11 // pred_region
          %s70 = ssub.s32 128, 128
          %71 = vsyncadd [#allocation3], %s70
          %s73 = sshll.u32 [#allocation2], 4
          %s74 = int_to_ptr.vmem [resolvable:$true] %s73
          %76 = dma.hbm_to_vmem [thread:$0]  %s0, 128, %s74, [#allocation3]
        $region16: #{tpu_custom_call.1} parent=11 // pred_fallthru
          _
      $region12: #{tpu_custom_call.1} parent=5 // pred_fallthru
        _
      %p77 = scmp.lt.s32.totalorder %s9, 2
      // Predicated region
      $region17: #{tpu_custom_call.1} parent=5 // pred_check
        %p78 = pneg %p77
      $region18: #{tpu_custom_call.1} parent=5 // pred_check_branch
        %80 = sbr.rel (%p78) target = $region20
      $region19: #{tpu_custom_call.1} parent=5 // pred_region
        _
      $region20: #{tpu_custom_call.1} parent=5 // pred_fallthru
        _
      %p81 = scmp.le.s32.totalorder 1, %s9
      %p82 = scmp.lt.s32.totalorder %s9, 3
      %p83 = pnand %p81, %p82
      %p84 = pneg %p83
      // Predicated region
      $region21: #{tpu_custom_call.1} parent=5 // pred_check
        _
      $region22: #{tpu_custom_call.1} parent=5 // pred_check_branch
        %86 = sbr.rel (%p83) target = $region24
      $region23: #{tpu_custom_call.1} parent=5 // pred_region
        %s87 = ssub.s32 %s9, 1
        // Predicated region
        $region25: #{tpu_custom_call.1} parent=23 // pred_check
          %p88 = pneg %p30
        $region26: #{tpu_custom_call.1} parent=23 // pred_check_branch
          %90 = sbr.rel (%p88) target = $region28
        $region27: #{tpu_custom_call.1} parent=23 // pred_region
          %91 = dma.done [#allocation3], 128
        $region28: #{tpu_custom_call.1} parent=23 // pred_fallthru
          _
        %p92 = pneg %p30
        %p93 = pneg %p27
        %p94 = pneg %p51
        %p95 = pneg %p48
        %v96 = vld [vmem:[#allocation2] sm:$0xff]
        %97 = vst [vmem:[#allocation5] sm:$0xff] %v96
        // Predicated region
        $region29: #{tpu_custom_call.1} parent=23 // pred_check
          %p98 = pneg %p48
        $region30: #{tpu_custom_call.1} parent=23 // pred_check_branch
          %100 = sbr.rel (%p98) target = $region32
        $region31: #{tpu_custom_call.1} parent=23 // pred_region
          %s102 = ssub.s32 128, 128
          %103 = vsyncadd [#allocation4], %s102
          %s105 = sshll.u32 [#allocation5], 4
          %s106 = int_to_ptr.vmem [resolvable:$true] %s105
          %108 = dma.vmem_to_hbm [thread:$0]  %s106, 128, %s1, [#allocation4]
        $region32: #{tpu_custom_call.1} parent=23 // pred_fallthru
          _
        // Predicated region
        $region33: #{tpu_custom_call.1} parent=23 // pred_check
          %p109 = pneg %p48
        $region34: #{tpu_custom_call.1} parent=23 // pred_check_branch
          %111 = sbr.rel (%p109) target = $region36
        $region35: #{tpu_custom_call.1} parent=23 // pred_region
          %112 = dma.done [#allocation4], 128
        $region36: #{tpu_custom_call.1} parent=23 // pred_fallthru
          _
      $region24: #{tpu_custom_call.1} parent=5 // pred_fallthru
        _
      %p113 = scmp.le.s32.totalorder 2, %s9
      // Predicated region
      $region37: #{tpu_custom_call.1} parent=5 // pred_check
        %p114 = pneg %p113
      $region38: #{tpu_custom_call.1} parent=5 // pred_check_branch
        %116 = sbr.rel (%p114) target = $region40
      $region39: #{tpu_custom_call.1} parent=5 // pred_region
        %s117 = ssub.s32 %s9, 2
      $region40: #{tpu_custom_call.1} parent=5 // pred_fallthru
        _
    $region6: #{tpu_custom_call.1} parent=1 // loop_footer
      %s13 = sadd.s32 1, %s9
    $region7: #{tpu_custom_call.1} parent=1 // loop_footer_branch
      %8 = sbr.rel target = $region3
    $region8: #{tpu_custom_call.1} parent=1 // loop_exit
      _
    %118 = vsyncpa [#allocation3], 1
    %s119 = scalar_lea.sflag [#allocation3], 1
    %120 = vsyncpa %s119, 1
    %121 = vsyncpa [#allocation4], 1
    %s122 = scalar_lea.sflag [#allocation4], 1
    %123 = vsyncpa %s122, 1

// kernel: tpu_custom_call.1
$region0: #{tpu_custom_call.1}
  #allocation0 [shape = 'u32[]', space=smem, size = 0x4, offset = 0x4, fixed_abs, tag = 'smem constant byte address 0x4 - core index']
  #allocation1 [shape = 'u32[144,128]{1,0:T(1,128)}', space=vmem, size = 0x12000, scoped, tag = 'internal scratch']
  %s0 = inlined_call_operand.hbm [shape: f32[16,128], index: 0, kind: input, shape index: {}]
  %s1 = inlined_call_operand.hbm [shape: bf16[128,128], index: 1, kind: input, shape index: {}]
  %s2 = inlined_call_operand.hbm [shape: bf16[128,128], index: 2, kind: input, shape index: {}]
  %s3 = inlined_call_operand.hbm [shape: bf16[128,128], index: 3, kind: input, shape index: {}]
  %s4 = inlined_call_operand.vmem [shape: f32[1,128], index: 4, kind: input, shape index: {}]
  %s5 = inlined_call_operand.vmem [shape: f32[1,128], index: 5, kind: input, shape index: {}]
  %s6 = inlined_call_operand.vmem [shape: f32[1,128], index: 6, kind: input, shape index: {}]
  %s7 = inlined_call_operand.hbm [shape: f32[16,128], index: 7, kind: output, shape index: {0}]
  %s8 = inlined_call_operand.hbm [shape: f32[16,128], index: 8, kind: output, shape index: {1}]
  %s9 = inlined_call_operand.hbm [shape: f32[16,128], index: 9, kind: output, shape index: {2}]
  %10 = xla_tuple %s7, %s8, %s9
  %s11 = sld [smem:[#allocation0]]
  $region93: #{tpu_custom_call.1} parent=0
    _
  %s13 = ssub.s32 1, %s11
  %s14 = scalar_select 0, %s13, %s11
  $region1: #{tpu_custom_call.1} parent=0
    #allocation2 [shape = 'u8[8192]{0}', space=vmem, size = 0x2000, scoped, tag = 'input window, operand 0']
    #allocation3 [shape = 's32[2]{0}', space=sflag, size = 0x8, scoped, tag = 'scoped memory for tpu_custom_call.1']
    #allocation4 [shape = 's32[2]{0}', space=sflag, size = 0x8, scoped, tag = 'scoped memory for tpu_custom_call.1']
    #allocation5 [shape = 'u8[32768]{0}', space=vmem, size = 0x8000, scoped, tag = 'input window, operand 1, single buffered']
    #allocation6 [shape = 's32[1]{0}', space=sflag, size = 0x4, scoped, tag = 'scoped memory for tpu_custom_call.1']
    #allocation7 [shape = 'u8[32768]{0}', space=vmem, size = 0x8000, scoped, tag = 'input window, operand 2, single buffered']
    #allocation8 [shape = 'u8[32768]{0}', space=vmem, size = 0x8000, scoped, tag = 'input window, operand 3, single buffered']
    #allocation9 [shape = 's32[1]{0}', space=sflag, size = 0x4, scoped, tag = 'scoped memory for tpu_custom_call.1']
    #allocation10 [shape = 'u8[8192]{0}', space=vmem, size = 0x2000, scoped, tag = 'output window, operand 0']
    #allocation11 [shape = 'u8[8192]{0}', space=vmem, size = 0x2000, scoped, tag = 'output window, operand 1']
    #allocation12 [shape = 's32[2]{0}', space=sflag, size = 0x8, scoped, tag = 'scoped memory for tpu_custom_call.1']
    #allocation13 [shape = 'u8[8192]{0}', space=vmem, size = 0x2000, scoped, tag = 'output window, operand 2']
    %15 = vsyncpa [#allocation3], 0
    %s16 = scalar_lea.sflag [#allocation3], 1
    %17 = vsyncpa %s16, 0
    %18 = vsyncpa [#allocation6], 0
    %19 = vsyncpa [#allocation9], 0
    %20 = vsyncpa [#allocation4], 0
    %s21 = scalar_lea.sflag [#allocation4], 1
    %22 = vsyncpa %s21, 0
    %23 = vsyncpa [#allocation12], 0
    %s24 = scalar_lea.sflag [#allocation12], 1
    %25 = vsyncpa %s24, 0
    loop: start=0, step=1, limit=4
    $region2: #{tpu_custom_call.1} parent=1 // loop_pre_header
      _
    $region3: #{tpu_custom_call.1} parent=1 // loop_header
      %s27 = sphi 0, %s31
      %p28 = scmp.ge.s32.totalorder %s27, 4
      %s37 = sphi 0, %s39
      %s40 = sphi 0, %s37
      %s41 = sphi 0, %s40
      %s57 = sphi 0, %s41
      %s61 = sphi 0, %s61
      %s63 = sphi 0, %s61
      %s64 = sphi 0, %s63
      %s78 = sphi 0, %s64
      %s82 = sphi 0, %s82
      %s84 = sphi 0, %s82
      %s85 = sphi 0, %s84
      %s99 = sphi 0, %s85
      %s103 = sphi 0, %s103
      %s105 = sphi 0, %s103
      %s106 = sphi 0, %s105
      %s120 = sphi 0, %s106
      %s124 = sphi 0, %s124
      %s126 = sphi 0, %s124
      %s127 = sphi 0, %s126
      %s141 = sphi 0, %s127
      %s145 = sphi 0, %s145
      %s147 = sphi 0, %s145
      %s148 = sphi 0, %s147
      %s162 = sphi 0, %s148
      %s166 = sphi 0, %s166
      %s168 = sphi 0, %s166
      %s169 = sphi 0, %s168
      %s183 = sphi 0, %s169
      %s189 = sphi 0, %s191
      %s192 = sphi 0, %s189
      %s193 = sphi 0, %s192
      %s209 = sphi 0, %s193
      %s215 = sphi 0, %s217
      %s218 = sphi 0, %s215
      %s219 = sphi 0, %s218
      %s235 = sphi 0, %s219
      %s241 = sphi 0, %s243
      %s244 = sphi 0, %s241
      %s245 = sphi 0, %s244
      %s261 = sphi 0, %s245
    $region4: #{tpu_custom_call.1} parent=1 // loop_header_branch
      %30 = sbr.rel (%p28) target = $region8
    $region5: #{tpu_custom_call.1} parent=1 // loop_body
      %s32 = ssub.s32 %s27, 1
      %s33 = ssub.s32 %s27, 2
      %s34 = sadd.s32 %s27, 1
      %s35 = ssub.s32 %s27, %s34
      %p36 = scmp.eq.s32.totalorder %s35, 0
      %s38 = sadd.s32 %s37, 1
      %s39 = scalar_select %p36, %s37, %s38
      %p42 = pneg %p36
      %p43 = scmp.eq.s32.totalorder %s27, 1
      %p44 = por %p42, %p43
      %p45 = scmp.ne.s32.totalorder %s37, %s40
      %p46 = scmp.eq.s32.totalorder %s27, 0
      %p47 = por %p45, %p46
      %p48 = scmp.ne.s32.totalorder %s37, %s40
      %p49 = scmp.eq.s32.totalorder %s32, 1
      %p50 = por %p48, %p49
      %p51 = scmp.ne.s32.totalorder %s40, %s41
      %p52 = scmp.eq.s32.totalorder %s32, 0
      %p53 = por %p51, %p52
      %p54 = scmp.ne.s32.totalorder %s40, %s41
      %p55 = scmp.eq.s32.totalorder %s33, 1
      %p56 = por %p54, %p55
      %p58 = scmp.ne.s32.totalorder %s41, %s57
      %p59 = scmp.eq.s32.totalorder %s33, 0
      %p60 = por %p58, %p59
      %s62 = sadd.s32 %s61, 1
      %p65 = scmp.eq.s32.totalorder %s27, 1
      %p66 = scmp.ne.s32.totalorder %s61, %s63
      %p67 = scmp.eq.s32.totalorder %s27, 0
      %p68 = por %p66, %p67
      %p69 = scmp.ne.s32.totalorder %s61, %s63
      %p70 = scmp.eq.s32.totalorder %s32, 1
      %p71 = por %p69, %p70
      %p72 = scmp.ne.s32.totalorder %s63, %s64
      %p73 = scmp.eq.s32.totalorder %s32, 0
      %p74 = por %p72, %p73
      %p75 = scmp.ne.s32.totalorder %s63, %s64
      %p76 = scmp.eq.s32.totalorder %s33, 1
      %p77 = por %p75, %p76
      %p79 = scmp.ne.s32.totalorder %s64, %s78
      %p80 = scmp.eq.s32.totalorder %s33, 0
      %p81 = por %p79, %p80
      %s83 = sadd.s32 %s82, 1
      %p86 = scmp.eq.s32.totalorder %s27, 1
      %p87 = scmp.ne.s32.totalorder %s82, %s84
      %p88 = scmp.eq.s32.totalorder %s27, 0
      %p89 = por %p87, %p88
      %p90 = scmp.ne.s32.totalorder %s82, %s84
      %p91 = scmp.eq.s32.totalorder %s32, 1
      %p92 = por %p90, %p91
      %p93 = scmp.ne.s32.totalorder %s84, %s85
      %p94 = scmp.eq.s32.totalorder %s32, 0
      %p95 = por %p93, %p94
      %p96 = scmp.ne.s32.totalorder %s84, %s85
      %p97 = scmp.eq.s32.totalorder %s33, 1
      %p98 = por %p96, %p97
      %p100 = scmp.ne.s32.totalorder %s85, %s99
      %p101 = scmp.eq.s32.totalorder %s33, 0
      %p102 = por %p100, %p101
      %s104 = sadd.s32 %s103, 1
      %p107 = scmp.eq.s32.totalorder %s27, 1
      %p108 = scmp.ne.s32.totalorder %s103, %s105
      %p109 = scmp.eq.s32.totalorder %s27, 0
      %p110 = por %p108, %p109
      %p111 = scmp.ne.s32.totalorder %s103, %s105
      %p112 = scmp.eq.s32.totalorder %s32, 1
      %p113 = por %p111, %p112
      %p114 = scmp.ne.s32.totalorder %s105, %s106
      %p115 = scmp.eq.s32.totalorder %s32, 0
      %p116 = por %p114, %p115
      %p117 = scmp.ne.s32.totalorder %s105, %s106
      %p118 = scmp.eq.s32.totalorder %s33, 1
      %p119 = por %p117, %p118
      %p121 = scmp.ne.s32.totalorder %s106, %s120
      %p122 = scmp.eq.s32.totalorder %s33, 0
      %p123 = por %p121, %p122
      %s125 = sadd.s32 %s124, 1
      %p128 = scmp.eq.s32.totalorder %s27, 1
      %p129 = scmp.ne.s32.totalorder %s124, %s126
      %p130 = scmp.eq.s32.totalorder %s27, 0
      %p131 = por %p129, %p130
      %p132 = scmp.ne.s32.totalorder %s124, %s126
      %p133 = scmp.eq.s32.totalorder %s32, 1
      %p134 = por %p132, %p133
      %p135 = scmp.ne.s32.totalorder %s126, %s127
      %p136 = scmp.eq.s32.totalorder %s32, 0
      %p137 = por %p135, %p136
      %p138 = scmp.ne.s32.totalorder %s126, %s127
      %p139 = scmp.eq.s32.totalorder %s33, 1
      %p140 = por %p138, %p139
      %p142 = scmp.ne.s32.totalorder %s127, %s141
      %p143 = scmp.eq.s32.totalorder %s33, 0
      %p144 = por %p142, %p143
      %s146 = sadd.s32 %s145, 1
      %p149 = scmp.eq.s32.totalorder %s27, 1
      %p150 = scmp.ne.s32.totalorder %s145, %s147
      %p151 = scmp.eq.s32.totalorder %s27, 0
      %p152 = por %p150, %p151
      %p153 = scmp.ne.s32.totalorder %s145, %s147
      %p154 = scmp.eq.s32.totalorder %s32, 1
      %p155 = por %p153, %p154
      %p156 = scmp.ne.s32.totalorder %s147, %s148
      %p157 = scmp.eq.s32.totalorder %s32, 0
      %p158 = por %p156, %p157
      %p159 = scmp.ne.s32.totalorder %s147, %s148
      %p160 = scmp.eq.s32.totalorder %s33, 1
      %p161 = por %p159, %p160
      %p163 = scmp.ne.s32.totalorder %s148, %s162
      %p164 = scmp.eq.s32.totalorder %s33, 0
      %p165 = por %p163, %p164
      %s167 = sadd.s32 %s166, 1
      %p170 = scmp.eq.s32.totalorder %s27, 1
      %p171 = scmp.ne.s32.totalorder %s166, %s168
      %p172 = scmp.eq.s32.totalorder %s27, 0
      %p173 = por %p171, %p172
      %p174 = scmp.ne.s32.totalorder %s166, %s168
      %p175 = scmp.eq.s32.totalorder %s32, 1
      %p176 = por %p174, %p175
      %p177 = scmp.ne.s32.totalorder %s168, %s169
      %p178 = scmp.eq.s32.totalorder %s32, 0
      %p179 = por %p177, %p178
      %p180 = scmp.ne.s32.totalorder %s168, %s169
      %p181 = scmp.eq.s32.totalorder %s33, 1
      %p182 = por %p180, %p181
      %p184 = scmp.ne.s32.totalorder %s169, %s183
      %p185 = scmp.eq.s32.totalorder %s33, 0
      %p186 = por %p184, %p185
      %s187 = ssub.s32 %s27, %s34
      %p188 = scmp.eq.s32.totalorder %s187, 0
      %s190 = sadd.s32 %s189, 1
      %s191 = scalar_select %p188, %s189, %s190
      %p194 = pneg %p188
      %p195 = scmp.eq.s32.totalorder %s27, 1
      %p196 = por %p194, %p195
      %p197 = scmp.ne.s32.totalorder %s189, %s192
      %p198 = scmp.eq.s32.totalorder %s27, 0
      %p199 = por %p197, %p198
      %p200 = scmp.ne.s32.totalorder %s189, %s192
      %p201 = scmp.eq.s32.totalorder %s32, 1
      %p202 = por %p200, %p201
      %p203 = scmp.ne.s32.totalorder %s192, %s193
      %p204 = scmp.eq.s32.totalorder %s32, 0
      %p205 = por %p203, %p204
      %p206 = scmp.ne.s32.totalorder %s192, %s193
      %p207 = scmp.eq.s32.totalorder %s33, 1
      %p208 = por %p206, %p207
      %p210 = scmp.ne.s32.totalorder %s193, %s209
      %p211 = scmp.eq.s32.totalorder %s33, 0
      %p212 = por %p210, %p211
      %s213 = ssub.s32 %s27, %s34
      %p214 = scmp.eq.s32.totalorder %s213, 0
      %s216 = sadd.s32 %s215, 1
      %s217 = scalar_select %p214, %s215, %s216
      %p220 = pneg %p214
      %p221 = scmp.eq.s32.totalorder %s27, 1
      %p222 = por %p220, %p221
      %p223 = scmp.ne.s32.totalorder %s215, %s218
      %p224 = scmp.eq.s32.totalorder %s27, 0
      %p225 = por %p223, %p224
      %p226 = scmp.ne.s32.totalorder %s215, %s218
      %p227 = scmp.eq.s32.totalorder %s32, 1
      %p228 = por %p226, %p227
      %p229 = scmp.ne.s32.totalorder %s218, %s219
      %p230 = scmp.eq.s32.totalorder %s32, 0
      %p231 = por %p229, %p230
      %p232 = scmp.ne.s32.totalorder %s218, %s219
      %p233 = scmp.eq.s32.totalorder %s33, 1
      %p234 = por %p232, %p233
      %p236 = scmp.ne.s32.totalorder %s219, %s235
      %p237 = scmp.eq.s32.totalorder %s33, 0
      %p238 = por %p236, %p237
      %s239 = ssub.s32 %s27, %s34
      %p240 = scmp.eq.s32.totalorder %s239, 0
      %s242 = sadd.s32 %s241, 1
      %s243 = scalar_select %p240, %s241, %s242
      %p246 = pneg %p240
      %p247 = scmp.eq.s32.totalorder %s27, 1
      %p248 = por %p246, %p247
      %p249 = scmp.ne.s32.totalorder %s241, %s244
      %p250 = scmp.eq.s32.totalorder %s27, 0
      %p251 = por %p249, %p250
      %p252 = scmp.ne.s32.totalorder %s241, %s244
      %p253 = scmp.eq.s32.totalorder %s32, 1
      %p254 = por %p252, %p253
      %p255 = scmp.ne.s32.totalorder %s244, %s245
      %p256 = scmp.eq.s32.totalorder %s32, 0
      %p257 = por %p255, %p256
      %p258 = scmp.ne.s32.totalorder %s244, %s245
      %p259 = scmp.eq.s32.totalorder %s33, 1
      %p260 = por %p258, %p259
      %p262 = scmp.ne.s32.totalorder %s245, %s261
      %p263 = scmp.eq.s32.totalorder %s33, 0
      %p264 = por %p262, %p263
      %p265 = scmp.le.s32.totalorder 1, %s27
      %p266 = scmp.lt.s32.totalorder %s27, 3
      %p267 = pnand %p265, %p266
      %p268 = pneg %p267
      // Predicated region
      $region9: #{tpu_custom_call.1} parent=5 // pred_check
        _
      $region10: #{tpu_custom_call.1} parent=5 // pred_check_branch
        %270 = sbr.rel (%p267) target = $region12
      $region11: #{tpu_custom_call.1} parent=5 // pred_region
        %s271 = ssub.s32 %s27, 1
        // Predicated region
        $region13: #{tpu_custom_call.1} parent=11 // pred_check
          %p272 = pneg %p74
        $region14: #{tpu_custom_call.1} parent=11 // pred_check_branch
          %274 = sbr.rel (%p272) target = $region16
        $region15: #{tpu_custom_call.1} parent=11 // pred_region
          %s276 = ssub.s32 1024, 1024
          %277 = vsyncadd [#allocation6], %s276
          %s278 = sshll.u32 [#allocation5], 4
          %s279 = int_to_ptr.vmem [resolvable:$true] %s278
          %284 = dma.hbm_to_vmem [thread:$0]  %s1, 1024, %s279, [#allocation6], 64, 64, 4
        $region16: #{tpu_custom_call.1} parent=11 // pred_fallthru
          _
        // Predicated region
        $region17: #{tpu_custom_call.1} parent=11 // pred_check
          %p285 = pneg %p95
        $region18: #{tpu_custom_call.1} parent=11 // pred_check_branch
          %287 = sbr.rel (%p285) target = $region20
        $region19: #{tpu_custom_call.1} parent=11 // pred_region
          %s289 = ssub.s32 1024, 1024
          %290 = vsyncadd [#allocation6], %s289
          %s291 = sshll.u32 [#allocation7], 4
          %s292 = int_to_ptr.vmem [resolvable:$true] %s291
          %297 = dma.hbm_to_vmem [thread:$0]  %s2, 1024, %s292, [#allocation6], 64, 64, 4
        $region20: #{tpu_custom_call.1} parent=11 // pred_fallthru
          _
        // Predicated region
        $region21: #{tpu_custom_call.1} parent=11 // pred_check
          %p298 = pneg %p116
        $region22: #{tpu_custom_call.1} parent=11 // pred_check_branch
          %300 = sbr.rel (%p298) target = $region24
        $region23: #{tpu_custom_call.1} parent=11 // pred_region
          %s302 = ssub.s32 1024, 1024
          %303 = vsyncadd [#allocation9], %s302
          %s304 = sshll.u32 [#allocation8], 4
          %s305 = int_to_ptr.vmem [resolvable:$true] %s304
          %310 = dma.hbm_to_vmem [thread:$0]  %s3, 1024, %s305, [#allocation9], 64, 64, 4
        $region24: #{tpu_custom_call.1} parent=11 // pred_fallthru
          _
        // Predicated region
        $region25: #{tpu_custom_call.1} parent=11 // pred_check
          %p311 = pneg %p137
        $region26: #{tpu_custom_call.1} parent=11 // pred_check_branch
          %313 = sbr.rel (%p311) target = $region28
        $region27: #{tpu_custom_call.1} parent=11 // pred_region
          _
        $region28: #{tpu_custom_call.1} parent=11 // pred_fallthru
          _
        // Predicated region
        $region29: #{tpu_custom_call.1} parent=11 // pred_check
          %p314 = pneg %p158
        $region30: #{tpu_custom_call.1} parent=11 // pred_check_branch
          %316 = sbr.rel (%p314) target = $region32
        $region31: #{tpu_custom_call.1} parent=11 // pred_region
          _
        $region32: #{tpu_custom_call.1} parent=11 // pred_fallthru
          _
        // Predicated region
        $region33: #{tpu_custom_call.1} parent=11 // pred_check
          %p317 = pneg %p179
        $region34: #{tpu_custom_call.1} parent=11 // pred_check_branch
          %319 = sbr.rel (%p317) target = $region36
        $region35: #{tpu_custom_call.1} parent=11 // pred_region
          _
        $region36: #{tpu_custom_call.1} parent=11 // pred_fallthru
          _
      $region12: #{tpu_custom_call.1} parent=5 // pred_fallthru
        _
      %p320 = scmp.lt.s32.totalorder %s27, 2
      // Predicated region
      $region37: #{tpu_custom_call.1} parent=5 // pred_check
        %p321 = pneg %p320
      $region38: #{tpu_custom_call.1} parent=5 // pred_check_branch
        %323 = sbr.rel (%p321) target = $region40
      $region39: #{tpu_custom_call.1} parent=5 // pred_region
        // Predicated region
        $region41: #{tpu_custom_call.1} parent=39 // pred_check
          %p324 = pneg %p47
        $region42: #{tpu_custom_call.1} parent=39 // pred_check_branch
          %326 = sbr.rel (%p324) target = $region44
        $region43: #{tpu_custom_call.1} parent=39 // pred_region
          %s327 = sand.u32 %s37, 1
          %s328 = scalar_lea.sflag [#allocation3], %s327
          %s329 = sand.u32 %s37, 1
          %s330 = smul.addr %s329, 8
          %s331 = scalar_lea.vmem [#allocation2], %s330
          %s333 = ssub.s32 128, 128
          %334 = vsyncadd %s328, %s333
          %s335 = smul.addr %s27, 128
          %s336 = scalar_lea.hbm %s0, %s335
          %s338 = sshll.u32 %s331, 4
          %s339 = int_to_ptr.vmem [resolvable:$true] %s338
          %341 = dma.hbm_to_vmem [thread:$0]  %s336, 128, %s339, %s328
        $region44: #{tpu_custom_call.1} parent=39 // pred_fallthru
          _
      $region40: #{tpu_custom_call.1} parent=5 // pred_fallthru
        _
      %p342 = scmp.le.s32.totalorder 1, %s27
      %p343 = scmp.lt.s32.totalorder %s27, 3
      %p344 = pnand %p342, %p343
      %p345 = pneg %p344
      // Predicated region
      $region45: #{tpu_custom_call.1} parent=5 // pred_check
        _
      $region46: #{tpu_custom_call.1} parent=5 // pred_check_branch
        %347 = sbr.rel (%p344) target = $region48
      $region47: #{tpu_custom_call.1} parent=5 // pred_region
        %s348 = ssub.s32 %s27, 1
        %s349 = sand.u32 %s40, 1
        %s350 = scalar_lea.sflag [#allocation3], %s349
        %s351 = sand.u32 %s40, 1
        %s352 = smul.addr %s351, 8
        %s353 = scalar_lea.vmem [#allocation2], %s352
        // Predicated region
        $region49: #{tpu_custom_call.1} parent=47 // pred_check
          %p354 = pneg %p53
        $region50: #{tpu_custom_call.1} parent=47 // pred_check_branch
          %356 = sbr.rel (%p354) target = $region52
        $region51: #{tpu_custom_call.1} parent=47 // pred_region
          %357 = dma.done %s350, 128
        $region52: #{tpu_custom_call.1} parent=47 // pred_fallthru
          _
        // Predicated region
        $region53: #{tpu_custom_call.1} parent=47 // pred_check
          %p358 = pneg %p74
        $region54: #{tpu_custom_call.1} parent=47 // pred_check_branch
          %360 = sbr.rel (%p358) target = $region56
        $region55: #{tpu_custom_call.1} parent=47 // pred_region
          %361 = dma.done [#allocation6], 1024
        $region56: #{tpu_custom_call.1} parent=47 // pred_fallthru
          _
        // Predicated region
        $region57: #{tpu_custom_call.1} parent=47 // pred_check
          %p362 = pneg %p95
        $region58: #{tpu_custom_call.1} parent=47 // pred_check_branch
          %364 = sbr.rel (%p362) target = $region60
        $region59: #{tpu_custom_call.1} parent=47 // pred_region
          %365 = dma.done [#allocation6], 1024
        $region60: #{tpu_custom_call.1} parent=47 // pred_fallthru
          _
        // Predicated region
        $region61: #{tpu_custom_call.1} parent=47 // pred_check
          %p366 = pneg %p116
        $region62: #{tpu_custom_call.1} parent=47 // pred_check_branch
          %368 = sbr.rel (%p366) target = $region64
        $region63: #{tpu_custom_call.1} parent=47 // pred_region
          %369 = dma.done [#allocation9], 1024
        $region64: #{tpu_custom_call.1} parent=47 // pred_fallthru
          _
        %s370 = sand.u32 %s40, 1
        %s371 = scalar_lea.sflag [#allocation3], %s370
        %s372 = sand.u32 %s40, 1
        %s373 = smul.addr %s372, 8
        %s374 = scalar_lea.vmem [#allocation2], %s373
        %p375 = pneg %p53
        %p376 = pneg %p50
        %p377 = pneg %p74
        %p378 = pneg %p71
        %p379 = pneg %p95
        %p380 = pneg %p92
        %p381 = pneg %p116
        %p382 = pneg %p113
        %p383 = pneg %p137
        %p384 = pneg %p134
        %p385 = pneg %p158
        %p386 = pneg %p155
        %p387 = pneg %p179
        %p388 = pneg %p176
        %p389 = pneg %p205
        %p390 = pneg %p202
        %s391 = sand.u32 %s192, 1
        %s392 = scalar_lea.sflag [#allocation4], %s391
        %s393 = sand.u32 %s192, 1
        %s394 = smul.addr %s393, 8
        %s395 = scalar_lea.vmem [#allocation10], %s394
        %p396 = pneg %p231
        %p397 = pneg %p228
        %s398 = sand.u32 %s32, 1
        %s399 = scalar_lea.sflag [#allocation12], %s398
        %s400 = sand.u32 %s218, 1
        %s401 = smul.addr %s400, 8
        %s402 = scalar_lea.vmem [#allocation11], %s401
        %p403 = pneg %p257
        %p404 = pneg %p254
        %s405 = sand.u32 %s32, 1
        %s406 = scalar_lea.sflag [#allocation12], %s405
        %s407 = sand.u32 %s244, 1
        %s408 = smul.addr %s407, 8
        %s409 = scalar_lea.vmem [#allocation13], %s408
        %v411 = vld [vmem:[%s353] sm:$0xff]
        %v412 = vpack.c.bf16 %v411, %v411
        %v413 = vld [vmem:[#allocation5] sm:$0xf]
        %v414 = vld [vmem:[#allocation5 + $0x4] sm:$0xf]
        %v415 = vld [vmem:[#allocation5 + $0x8] sm:$0xf]
        %v416 = vld [vmem:[#allocation5 + $0xc] sm:$0xf]
        %v417 = vld [vmem:[#allocation5 + $0x10] sm:$0xf]
        %v418 = vld [vmem:[#allocation5 + $0x14] sm:$0xf]
        %v419 = vld [vmem:[#allocation5 + $0x18] sm:$0xf]
        %v420 = vld [vmem:[#allocation5 + $0x1c] sm:$0xf]
        %v421 = vld [vmem:[#allocation5 + $0x20] sm:$0xf]
        %v422 = vld [vmem:[#allocation5 + $0x24] sm:$0xf]
        %v423 = vld [vmem:[#allocation5 + $0x28] sm:$0xf]
        %v424 = vld [vmem:[#allocation5 + $0x2c] sm:$0xf]
        %v425 = vld [vmem:[#allocation5 + $0x30] sm:$0xf]
        %v426 = vld [vmem:[#allocation5 + $0x34] sm:$0xf]
        %v427 = vld [vmem:[#allocation5 + $0x38] sm:$0xf]
        %v428 = vld [vmem:[#allocation5 + $0x3c] sm:$0xf]
        %v429 = vld [vmem:[%s4] sm:$0x1]
        %v431 = vlaneseq
        %v432 = vshrl.u32 %v431, 7
        %v433 = vsub.s32 0, %v432
        %v434 = vrot.slane %v429, %v433
        %v452 = vunpack.c.l.b16 %v413
        %v453 = vunpack.c.l.b16 %v414
        %v454 = vunpack.c.l.b16 %v415
        %v455 = vunpack.c.l.b16 %v416
        %v456 = vunpack.c.l.b16 %v417
        %v457 = vunpack.c.l.b16 %v418
        %v458 = vunpack.c.l.b16 %v419
        %v459 = vunpack.c.l.b16 %v420
        %v460 = vunpack.c.l.b16 %v421
        %v461 = vunpack.c.l.b16 %v422
        %v462 = vunpack.c.l.b16 %v423
        %v463 = vunpack.c.l.b16 %v424
        %v464 = vunpack.c.l.b16 %v425
        %v465 = vunpack.c.l.b16 %v426
        %v466 = vunpack.c.l.b16 %v427
        %v467 = vunpack.c.l.b16 %v428
        %v468 = vpack.c.b16 %v453, %v452
        %v469 = vpack.c.b16 %v455, %v454
        %v470 = vpack.c.b16 %v457, %v456
        %v471 = vpack.c.b16 %v459, %v458
        %v472 = vpack.c.b16 %v461, %v460
        %v473 = vpack.c.b16 %v463, %v462
        %v474 = vpack.c.b16 %v465, %v464
        %v475 = vpack.c.b16 %v467, %v466
        %484 = vmatprep.subr.bf16.mxu0 0
        %485 = vmatpush1.bf16.msra.mxu0 %v468
        %486 = vmatprep.subr.bf16.mxu0 0
        %487 = vmatpush1.bf16.msra.mxu0 %v469
        %488 = vmatprep.subr.bf16.mxu0 0
        %489 = vmatpush1.bf16.msra.mxu0 %v470
        %490 = vmatprep.subr.bf16.mxu0 0
        %491 = vmatpush1.bf16.msra.mxu0 %v471
        %492 = vmatprep.subr.bf16.mxu0 0
        %493 = vmatpush1.bf16.msra.mxu0 %v472
        %494 = vmatprep.subr.bf16.mxu0 0
        %495 = vmatpush1.bf16.msra.mxu0 %v473
        %496 = vmatprep.subr.bf16.mxu0 0
        %497 = vmatpush1.bf16.msra.mxu0 %v474
        %498 = vmatprep.subr.bf16.mxu0 0
        %499 = vmatpush1.bf16.msra.mxu0 %v475
        %500 = vmatprep.subr.bf16.mxu0 0
        %501 = vmatpush1.bf16.msra.mxu0 0
        %502 = vmatprep.subr.bf16.mxu0 0
        %503 = vmatpush1.bf16.msra.mxu0 0
        %504 = vmatprep.subr.bf16.mxu0 0
        %505 = vmatpush1.bf16.msra.mxu0 0
        %506 = vmatprep.subr.bf16.mxu0 0
        %507 = vmatpush1.bf16.msra.mxu0 0
        %508 = vmatprep.subr.bf16.mxu0 0
        %509 = vmatpush1.bf16.msra.mxu0 0
        %510 = vmatprep.subr.bf16.mxu0 0
        %511 = vmatpush1.bf16.msra.mxu0 0
        %512 = vmatprep.subr.bf16.mxu0 0
        %513 = vmatpush1.bf16.msra.mxu0 0
        %514 = vmatprep.subr.bf16.mxu0 0
        %515 = vmatpush1.bf16.msra.mxu0 0
        %516 = vmatprep.mubr.bf16.mxu0 0
        %517 = vmatmul.mubr.bf16.gmra.mrb[0].mxu0 %v412
        %v518 = vpop.f32.mrb[0].mxu0
        %v519 = vadd.f32 %v434, %v518
        %v520 = vpop.f32.mrb[0].mxu0
        %v521 = vpop.f32.mrb[0].mxu0
        %v522 = vpop.f32.mrb[0].mxu0
        %523 = vdwg.mxu0
        %524 = vst [vmem:[%s395] sm:$0xff] %v519
        %v525 = vld [vmem:[#allocation7] sm:$0xf]
        %v526 = vld [vmem:[#allocation7 + $0x4] sm:$0xf]
        %v527 = vld [vmem:[#allocation7 + $0x8] sm:$0xf]
        %v528 = vld [vmem:[#allocation7 + $0xc] sm:$0xf]
        %v529 = vld [vmem:[#allocation7 + $0x10] sm:$0xf]
        %v530 = vld [vmem:[#allocation7 + $0x14] sm:$0xf]
        %v531 = vld [vmem:[#allocation7 + $0x18] sm:$0xf]
        %v532 = vld [vmem:[#allocation7 + $0x1c] sm:$0xf]
        %v533 = vld [vmem:[#allocation7 + $0x20] sm:$0xf]
        %v534 = vld [vmem:[#allocation7 + $0x24] sm:$0xf]
        %v535 = vld [vmem:[#allocation7 + $0x28] sm:$0xf]
        %v536 = vld [vmem:[#allocation7 + $0x2c] sm:$0xf]
        %v537 = vld [vmem:[#allocation7 + $0x30] sm:$0xf]
        %v538 = vld [vmem:[#allocation7 + $0x34] sm:$0xf]
        %v539 = vld [vmem:[#allocation7 + $0x38] sm:$0xf]
        %v540 = vld [vmem:[#allocation7 + $0x3c] sm:$0xf]
        %v541 = vld [vmem:[%s5] sm:$0x1]
        %v543 = vlaneseq
        %v544 = vshrl.u32 %v543, 7
        %v545 = vsub.s32 0, %v544
        %v546 = vrot.slane %v541, %v545
        %v564 = vunpack.c.l.b16 %v525
        %v565 = vunpack.c.l.b16 %v526
        %v566 = vunpack.c.l.b16 %v527
        %v567 = vunpack.c.l.b16 %v528
        %v568 = vunpack.c.l.b16 %v529
        %v569 = vunpack.c.l.b16 %v530
        %v570 = vunpack.c.l.b16 %v531
        %v571 = vunpack.c.l.b16 %v532
        %v572 = vunpack.c.l.b16 %v533
        %v573 = vunpack.c.l.b16 %v534
        %v574 = vunpack.c.l.b16 %v535
        %v575 = vunpack.c.l.b16 %v536
        %v576 = vunpack.c.l.b16 %v537
        %v577 = vunpack.c.l.b16 %v538
        %v578 = vunpack.c.l.b16 %v539
        %v579 = vunpack.c.l.b16 %v540
        %v580 = vpack.c.b16 %v565, %v564
        %v581 = vpack.c.b16 %v567, %v566
        %v582 = vpack.c.b16 %v569, %v568
        %v583 = vpack.c.b16 %v571, %v570
        %v584 = vpack.c.b16 %v573, %v572
        %v585 = vpack.c.b16 %v575, %v574
        %v586 = vpack.c.b16 %v577, %v576
        %v587 = vpack.c.b16 %v579, %v578
        %596 = vmatprep.subr.bf16.mxu0 0
        %597 = vmatpush1.bf16.msra.mxu0 %v580
        %598 = vmatprep.subr.bf16.mxu0 0
        %599 = vmatpush1.bf16.msra.mxu0 %v581
        %600 = vmatprep.subr.bf16.mxu0 0
        %601 = vmatpush1.bf16.msra.mxu0 %v582
        %602 = vmatprep.subr.bf16.mxu0 0
        %603 = vmatpush1.bf16.msra.mxu0 %v583
        %604 = vmatprep.subr.bf16.mxu0 0
        %605 = vmatpush1.bf16.msra.mxu0 %v584
        %606 = vmatprep.subr.bf16.mxu0 0
        %607 = vmatpush1.bf16.msra.mxu0 %v585
        %608 = vmatprep.subr.bf16.mxu0 0
        %609 = vmatpush1.bf16.msra.mxu0 %v586
        %610 = vmatprep.subr.bf16.mxu0 0
        %611 = vmatpush1.bf16.msra.mxu0 %v587
        %612 = vmatprep.subr.bf16.mxu0 0
        %613 = vmatpush1.bf16.msra.mxu0 0
        %614 = vmatprep.subr.bf16.mxu0 0
        %615 = vmatpush1.bf16.msra.mxu0 0
        %616 = vmatprep.subr.bf16.mxu0 0
        %617 = vmatpush1.bf16.msra.mxu0 0
        %618 = vmatprep.subr.bf16.mxu0 0
        %619 = vmatpush1.bf16.msra.mxu0 0
        %620 = vmatprep.subr.bf16.mxu0 0
        %621 = vmatpush1.bf16.msra.mxu0 0
        %622 = vmatprep.subr.bf16.mxu0 0
        %623 = vmatpush1.bf16.msra.mxu0 0
        %624 = vmatprep.subr.bf16.mxu0 0
        %625 = vmatpush1.bf16.msra.mxu0 0
        %626 = vmatprep.subr.bf16.mxu0 0
        %627 = vmatpush1.bf16.msra.mxu0 0
        %628 = vmatprep.mubr.bf16.mxu0 0
        %629 = vmatmul.mubr.bf16.gmra.mrb[0].mxu0 %v412
        %v630 = vpop.f32.mrb[0].mxu0
        %v631 = vadd.f32 %v546, %v630
        %v632 = vpop.f32.mrb[0].mxu0
        %v633 = vpop.f32.mrb[0].mxu0
        %v634 = vpop.f32.mrb[0].mxu0
        %635 = vdwg.mxu0
        %636 = vst [vmem:[%s402] sm:$0xff] %v631
        %v637 = vld [vmem:[#allocation8] sm:$0xf]
        %v638 = vld [vmem:[#allocation8 + $0x4] sm:$0xf]
        %v639 = vld [vmem:[#allocation8 + $0x8] sm:$0xf]
        %v640 = vld [vmem:[#allocation8 + $0xc] sm:$0xf]
        %v641 = vld [vmem:[#allocation8 + $0x10] sm:$0xf]
        %v642 = vld [vmem:[#allocation8 + $0x14] sm:$0xf]
        %v643 = vld [vmem:[#allocation8 + $0x18] sm:$0xf]
        %v644 = vld [vmem:[#allocation8 + $0x1c] sm:$0xf]
        %v645 = vld [vmem:[#allocation8 + $0x20] sm:$0xf]
        %v646 = vld [vmem:[#allocation8 + $0x24] sm:$0xf]
        %v647 = vld [vmem:[#allocation8 + $0x28] sm:$0xf]
        %v648 = vld [vmem:[#allocation8 + $0x2c] sm:$0xf]
        %v649 = vld [vmem:[#allocation8 + $0x30] sm:$0xf]
        %v650 = vld [vmem:[#allocation8 + $0x34] sm:$0xf]
        %v651 = vld [vmem:[#allocation8 + $0x38] sm:$0xf]
        %v652 = vld [vmem:[#allocation8 + $0x3c] sm:$0xf]
        %v653 = vld [vmem:[%s6] sm:$0x1]
        %v655 = vlaneseq
        %v656 = vshrl.u32 %v655, 7
        %v657 = vsub.s32 0, %v656
        %v658 = vrot.slane %v653, %v657
        %v676 = vunpack.c.l.b16 %v637
        %v677 = vunpack.c.l.b16 %v638
        %v678 = vunpack.c.l.b16 %v639
        %v679 = vunpack.c.l.b16 %v640
        %v680 = vunpack.c.l.b16 %v641
        %v681 = vunpack.c.l.b16 %v642
        %v682 = vunpack.c.l.b16 %v643
        %v683 = vunpack.c.l.b16 %v644
        %v684 = vunpack.c.l.b16 %v645
        %v685 = vunpack.c.l.b16 %v646
        %v686 = vunpack.c.l.b16 %v647
        %v687 = vunpack.c.l.b16 %v648
        %v688 = vunpack.c.l.b16 %v649
        %v689 = vunpack.c.l.b16 %v650
        %v690 = vunpack.c.l.b16 %v651
        %v691 = vunpack.c.l.b16 %v652
        %v692 = vpack.c.b16 %v677, %v676
        %v693 = vpack.c.b16 %v679, %v678
        %v694 = vpack.c.b16 %v681, %v680
        %v695 = vpack.c.b16 %v683, %v682
        %v696 = vpack.c.b16 %v685, %v684
        %v697 = vpack.c.b16 %v687, %v686
        %v698 = vpack.c.b16 %v689, %v688
        %v699 = vpack.c.b16 %v691, %v690
        %708 = vmatprep.subr.bf16.mxu0 0
        %709 = vmatpush1.bf16.msra.mxu0 %v692
        %710 = vmatprep.subr.bf16.mxu0 0
        %711 = vmatpush1.bf16.msra.mxu0 %v693
        %712 = vmatprep.subr.bf16.mxu0 0
        %713 = vmatpush1.bf16.msra.mxu0 %v694
        %714 = vmatprep.subr.bf16.mxu0 0
        %715 = vmatpush1.bf16.msra.mxu0 %v695
        %716 = vmatprep.subr.bf16.mxu0 0
        %717 = vmatpush1.bf16.msra.mxu0 %v696
        %718 = vmatprep.subr.bf16.mxu0 0
        %719 = vmatpush1.bf16.msra.mxu0 %v697
        %720 = vmatprep.subr.bf16.mxu0 0
        %721 = vmatpush1.bf16.msra.mxu0 %v698
        %722 = vmatprep.subr.bf16.mxu0 0
        %723 = vmatpush1.bf16.msra.mxu0 %v699
        %724 = vmatprep.subr.bf16.mxu0 0
        %725 = vmatpush1.bf16.msra.mxu0 0
        %726 = vmatprep.subr.bf16.mxu0 0
        %727 = vmatpush1.bf16.msra.mxu0 0
        %728 = vmatprep.subr.bf16.mxu0 0
        %729 = vmatpush1.bf16.msra.mxu0 0
        %730 = vmatprep.subr.bf16.mxu0 0
        %731 = vmatpush1.bf16.msra.mxu0 0
        %732 = vmatprep.subr.bf16.mxu0 0
        %733 = vmatpush1.bf16.msra.mxu0 0
        %734 = vmatprep.subr.bf16.mxu0 0
        %735 = vmatpush1.bf16.msra.mxu0 0
        %736 = vmatprep.subr.bf16.mxu0 0
        %737 = vmatpush1.bf16.msra.mxu0 0
        %738 = vmatprep.subr.bf16.mxu0 0
        %739 = vmatpush1.bf16.msra.mxu0 0
        %740 = vmatprep.mubr.bf16.mxu0 0
        %741 = vmatmul.mubr.bf16.gmra.mrb[0].mxu0 %v412
        %v742 = vpop.f32.mrb[0].mxu0
        %v743 = vadd.f32 %v658, %v742
        %v744 = vpop.f32.mrb[0].mxu0
        %v745 = vpop.f32.mrb[0].mxu0
        %v746 = vpop.f32.mrb[0].mxu0
        %747 = vdwg.mxu0
        %748 = vst [vmem:[%s409] sm:$0xff] %v743
        %s749 = sand.u32 %s192, 1
        %s750 = scalar_lea.sflag [#allocation4], %s749
        %s751 = sand.u32 %s192, 1
        %s752 = smul.addr %s751, 8
        %s753 = scalar_lea.vmem [#allocation10], %s752
        %s754 = sand.u32 %s32, 1
        %s755 = scalar_lea.sflag [#allocation12], %s754
        %s756 = sand.u32 %s218, 1
        %s757 = smul.addr %s756, 8
        %s758 = scalar_lea.vmem [#allocation11], %s757
        %s759 = sand.u32 %s32, 1
        %s760 = scalar_lea.sflag [#allocation12], %s759
        %s761 = sand.u32 %s244, 1
        %s762 = smul.addr %s761, 8
        %s763 = scalar_lea.vmem [#allocation13], %s762
        // Predicated region
        $region65: #{tpu_custom_call.1} parent=47 // pred_check
          %p764 = pneg %p202
        $region66: #{tpu_custom_call.1} parent=47 // pred_check_branch
          %766 = sbr.rel (%p764) target = $region68
        $region67: #{tpu_custom_call.1} parent=47 // pred_region
          %s768 = ssub.s32 128, 128
          %769 = vsyncadd %s750, %s768
          %s770 = smul.addr %s32, 128
          %s771 = scalar_lea.hbm %s7, %s770
          %s773 = sshll.u32 %s753, 4
          %s774 = int_to_ptr.vmem [resolvable:$true] %s773
          %776 = dma.vmem_to_hbm [thread:$0]  %s774, 128, %s771, %s750
        $region68: #{tpu_custom_call.1} parent=47 // pred_fallthru
          _
        // Predicated region
        $region69: #{tpu_custom_call.1} parent=47 // pred_check
          %p777 = pneg %p228
        $region70: #{tpu_custom_call.1} parent=47 // pred_check_branch
          %779 = sbr.rel (%p777) target = $region72
        $region71: #{tpu_custom_call.1} parent=47 // pred_region
          %s781 = ssub.s32 128, 128
          %782 = vsyncadd %s755, %s781
          %s783 = smul.addr %s32, 128
          %s784 = scalar_lea.hbm %s8, %s783
          %s786 = sshll.u32 %s758, 4
          %s787 = int_to_ptr.vmem [resolvable:$true] %s786
          %789 = dma.vmem_to_hbm [thread:$0]  %s787, 128, %s784, %s755
        $region72: #{tpu_custom_call.1} parent=47 // pred_fallthru
          _
        // Predicated region
        $region73: #{tpu_custom_call.1} parent=47 // pred_check
          %p790 = pneg %p254
        $region74: #{tpu_custom_call.1} parent=47 // pred_check_branch
          %792 = sbr.rel (%p790) target = $region76
        $region75: #{tpu_custom_call.1} parent=47 // pred_region
          %s794 = ssub.s32 128, 128
          %795 = vsyncadd %s760, %s794
          %s796 = smul.addr %s32, 128
          %s797 = scalar_lea.hbm %s9, %s796
          %s799 = sshll.u32 %s763, 4
          %s800 = int_to_ptr.vmem [resolvable:$true] %s799
          %802 = dma.vmem_to_hbm [thread:$0]  %s800, 128, %s797, %s760
        $region76: #{tpu_custom_call.1} parent=47 // pred_fallthru
          _
      $region48: #{tpu_custom_call.1} parent=5 // pred_fallthru
        _
      %p803 = scmp.le.s32.totalorder 2, %s27
      // Predicated region
      $region77: #{tpu_custom_call.1} parent=5 // pred_check
        %p804 = pneg %p803
      $region78: #{tpu_custom_call.1} parent=5 // pred_check_branch
        %806 = sbr.rel (%p804) target = $region80
      $region79: #{tpu_custom_call.1} parent=5 // pred_region
        %s807 = ssub.s32 %s27, 2
        // Predicated region
        $region81: #{tpu_custom_call.1} parent=79 // pred_check
          %p808 = pneg %p208
        $region82: #{tpu_custom_call.1} parent=79 // pred_check_branch
          %810 = sbr.rel (%p808) target = $region84
        $region83: #{tpu_custom_call.1} parent=79 // pred_region
          %s811 = sand.u32 %s193, 1
          %s812 = scalar_lea.sflag [#allocation4], %s811
          %s813 = sand.u32 %s193, 1
          %s814 = smul.addr %s813, 8
          %s815 = scalar_lea.vmem [#allocation10], %s814
          %816 = dma.done %s812, 128
        $region84: #{tpu_custom_call.1} parent=79 // pred_fallthru
          _
        // Predicated region
        $region85: #{tpu_custom_call.1} parent=79 // pred_check
          %p817 = pneg %p234
        $region86: #{tpu_custom_call.1} parent=79 // pred_check_branch
          %819 = sbr.rel (%p817) target = $region88
        $region87: #{tpu_custom_call.1} parent=79 // pred_region
          %s820 = sand.u32 %s33, 1
          %s821 = scalar_lea.sflag [#allocation12], %s820
          %s822 = sand.u32 %s219, 1
          %s823 = smul.addr %s822, 8
          %s824 = scalar_lea.vmem [#allocation11], %s823
          %825 = dma.done %s821, 128
        $region88: #{tpu_custom_call.1} parent=79 // pred_fallthru
          _
        // Predicated region
        $region89: #{tpu_custom_call.1} parent=79 // pred_check
          %p826 = pneg %p260
        $region90: #{tpu_custom_call.1} parent=79 // pred_check_branch
          %828 = sbr.rel (%p826) target = $region92
        $region91: #{tpu_custom_call.1} parent=79 // pred_region
          %s829 = sand.u32 %s33, 1
          %s830 = scalar_lea.sflag [#allocation12], %s829
          %s831 = sand.u32 %s245, 1
          %s832 = smul.addr %s831, 8
          %s833 = scalar_lea.vmem [#allocation13], %s832
          %834 = dma.done %s830, 128
        $region92: #{tpu_custom_call.1} parent=79 // pred_fallthru
          _
      $region80: #{tpu_custom_call.1} parent=5 // pred_fallthru
        _
    $region6: #{tpu_custom_call.1} parent=1 // loop_footer
      %s31 = sadd.s32 1, %s27
    $region7: #{tpu_custom_call.1} parent=1 // loop_footer_branch
      %26 = sbr.rel target = $region3
    $region8: #{tpu_custom_call.1} parent=1 // loop_exit
      _
    %835 = vsyncpa [#allocation3], 1
    %s836 = scalar_lea.sflag [#allocation3], 1
    %837 = vsyncpa %s836, 1
    %838 = vsyncpa [#allocation6], 1
    %839 = vsyncpa [#allocation9], 1
    %840 = vsyncpa [#allocation4], 1
    %s841 = scalar_lea.sflag [#allocation4], 1
    %842 = vsyncpa %s841, 1
    %843 = vsyncpa [#allocation12], 1
    %s844 = scalar_lea.sflag [#allocation12], 1
    %845 = vsyncpa %s844, 1

</llo_original>
